<compile_context>
chip_gen: v6e
topology: v6e:2x2x1
jax: 0.10.0
libtpu: 0.0.40
codegen_flags: <defaults>
</compile_context>

<pallas_src>
import jax
import jax.numpy as jnp
from jax.experimental import pallas as pl
from jax.experimental.pallas import tpu as pltpu


def _round_up(x, m):
    return ((x + m - 1) // m) * m


def _cdiv(a, b):
    return (a + b - 1) // b


def _disc_kernel(states_ref, actions_ref, act_tbl_ref,
                 w1s_ref, w2_ref, b2_ref, w3_ref, b3_ref,
                 out_ref):
    """Feature-major forward: the batch axis lives on the lane dimension."""
    cd = w1s_ref.dtype                       # MXU operand dtype (f32 or bf16)

    x = states_ref[...]                      # (TB, S)  batch-major as delivered
    actions = actions_ref[...]               # (1, TB)  int32

    # ---- Layer 1: Linear(concat([states, emb]) -> H), computed transposed ----
    # States half on the MXU in NT form: h1[h, b] = sum_s W1_top[s, h] * x[b, s].
    h1 = jax.lax.dot_general(
        w1s_ref[...], x,
        dimension_numbers=(((1,), (1,)), ((), ())),
        preferred_element_type=jnp.float32)                       # (H, TB) f32

    # Embedding half via one-hot matmul on the MXU.
    # act_tbl = (Emb @ W1_bot + b1)^T, zero-padded along actions to a multiple of 8.
    a_pad = act_tbl_ref.shape[1]
    tb = actions_ref.shape[1]
    a_iota = jax.lax.broadcasted_iota(jnp.int32, (a_pad, tb), 0)  # (A_pad, TB)
    onehot = (a_iota == actions).astype(cd)                       # (A_pad, TB)
    h1 = h1 + jnp.dot(act_tbl_ref[...], onehot,
                      preferred_element_type=jnp.float32)         # (H, TB) f32
    h1 = jnp.tanh(h1)

    # ---- Layer 2: Linear(H -> H) + tanh, still feature-major ----------------
    h2 = jnp.tanh(
        jnp.dot(w2_ref[...], h1.astype(cd),
                preferred_element_type=jnp.float32) + b2_ref[...])  # (H, TB)

    # ---- Layer 3: Linear(H -> 1) as broadcast-mul + sublane reduce ----------
    # Keeps the output lane-dense: a single (1, TB) row of unmasked stores.
    logits = jnp.sum(h2 * w3_ref[...], axis=0, keepdims=True) + b3_ref[0, 0]
    out_ref[...] = jax.nn.sigmoid(logits)                          # (1, TB) f32


def discrete_discriminator_forward(states, actions, params, *,
                                   tile_b=4096, compute_dtype=jnp.float32):
    """states: (B, S) f32, actions: (B,) int  ->  sigmoid(logits), shape (B, 1).

    compute_dtype=jnp.bfloat16 halves the HBM traffic of the dominant `states`
    stream (f32 MXU accumulation kept) — recommended on v5e/v6e; the f32
    default matches the reference to ~1e-5.
    """
    states = jnp.asarray(states)
    actions = jnp.asarray(actions)

    B, S = states.shape
    A, s_emb = params["emb"].shape
    assert s_emb == S
    H = params["w2"].shape[0]

    # Fold the action-embedding path:  act_table[a] = emb[a] @ W1_bot + b1,
    # transposed to (H, A_pad) and zero-padded along actions so the in-kernel
    # one-hot matmul has a sublane-aligned contracting dim.
    # TODO(synk): out-of-range action ids contribute zero here instead of
    # raising like torch.nn.Embedding.
    w1 = params["w1"]
    a_pad = _round_up(max(A, 8), 8)
    act_table_t = jnp.zeros((H, a_pad), jnp.float32).at[:, :A].set(
        (params["emb"] @ w1[S:] + params["b1"]).T).astype(compute_dtype)

    w1s_t = w1[:S].T.astype(compute_dtype)                    # (H, S)
    w2_t = params["w2"].T.astype(compute_dtype)               # (H, H)
    b2_c = params["b2"].reshape(H, 1).astype(jnp.float32)     # (H, 1)
    w3_c = params["w3"].reshape(H, 1).astype(jnp.float32)     # (H, 1)
    b3 = params["b3"].reshape(1, 1).astype(jnp.float32)       # (1, 1) -> SMEM

    states_cd = states.astype(compute_dtype)                  # no copy when f32
    actions_row = actions.astype(jnp.int32).reshape(1, B)     # batch on lanes

    # --- Batch tiling: no pad copy of states; the last block may be partial
    # (OOB output writes are dropped; garbage tail columns are column-local). ---
    tile_b = max(128, (int(tile_b) // 128) * 128)
    if B <= 128:
        tb = B                                 # single full-extent block
    else:
        # Cap so the grid has >= 2 steps (both v7x TensorCores get work).
        tb = min(tile_b, _round_up(_cdiv(B, 2), 128))
    grid = _cdiv(B, tb)

    grid_spec = pltpu.PrefetchScalarGridSpec(
        num_scalar_prefetch=0,
        grid=(grid,),
        in_specs=[
            pl.BlockSpec((tb, S), lambda i: (i, 0)),            # states: tiled
            pl.BlockSpec((1, tb), lambda i: (0, i)),            # actions: tiled
            pl.BlockSpec((H, a_pad), lambda i: (0, 0)),         # act table: resident
            pl.BlockSpec((H, S), lambda i: (0, 0)),             # W1_top^T: resident
            pl.BlockSpec((H, H), lambda i: (0, 0)),             # W2^T: resident
            pl.BlockSpec((H, 1), lambda i: (0, 0)),             # b2: resident
            pl.BlockSpec((H, 1), lambda i: (0, 0)),             # w3: resident
            pl.BlockSpec(memory_space=pltpu.MemorySpace.SMEM),  # b3 scalar
        ],
        out_specs=pl.BlockSpec((1, tb), lambda i: (0, i)),      # lane-dense output
    )

    out_row = pl.pallas_call(
        _disc_kernel,
        out_shape=jax.ShapeDtypeStruct((1, B), jnp.float32),
        grid_spec=grid_spec,
        compiler_params=pltpu.CompilerParams(
            dimension_semantics=("parallel",),   # megacore split on v7x
            vmem_limit_bytes=32 * 1024 * 1024,
        ),
    )(states_cd, actions_row, act_table_t, w1s_t, w2_t, b2_c, w3_c, b3)

    return out_row.reshape(B, 1)


def init_params(key, state_dim, action_dim, hidden_dim=32):
    ks = jax.random.split(key, 7)
    scale = 0.1
    return {
        "emb": scale * jax.random.normal(ks[0], (action_dim, state_dim), jnp.float32),
        "w1": scale * jax.random.normal(ks[1], (2 * state_dim, hidden_dim), jnp.float32),
        "b1": scale * jax.random.normal(ks[2], (1, hidden_dim), jnp.float32),
        "w2": scale * jax.random.normal(ks[3], (hidden_dim, hidden_dim), jnp.float32),
        "b2": scale * jax.random.normal(ks[4], (1, hidden_dim), jnp.float32),
        "w3": scale * jax.random.normal(ks[5], (hidden_dim, 1), jnp.float32),
        "b3": scale * jax.random.normal(ks[6], (1, 1), jnp.float32),
    }


def reference_forward(states, actions, params):
    """Plain-JAX reference matching the PyTorch module semantics."""
    emb = params["emb"][actions.astype(jnp.int32)]            # (B, S)
    x = jnp.concatenate([states, emb], axis=-1)               # (B, 2S)
    h1 = jnp.tanh(x @ params["w1"] + params["b1"])
    h2 = jnp.tanh(h1 @ params["w2"] + params["b2"])
    return jax.nn.sigmoid(h2 @ params["w3"] + params["b3"])


if __name__ == "__main__":
    state_dim, action_dim, hidden_dim = 16, 4, 32
    batch = 8

    key = jax.random.PRNGKey(0)
    k_param, k_state, k_act = jax.random.split(key, 3)

    params = init_params(k_param, state_dim, action_dim, hidden_dim)
    states = jax.random.normal(k_state, (batch, state_dim), jnp.float32)
    actions = jax.random.randint(k_act, (batch,), 0, action_dim, jnp.int32)

    ref = reference_forward(states, actions, params)

    # f32 path, single small block (exact match to reference).
    out = discrete_discriminator_forward(states, actions, params)
    out = jax.block_until_ready(out)
    assert out.shape == (batch, 1)
    assert jnp.allclose(out, ref, atol=1e-5, rtol=1e-5), (out, ref)

    # Multi-tile path with a partial, non-padded tail block (B=200, tb=128).
    big_b = 200
    k_s2, k_a2 = jax.random.split(jax.random.PRNGKey(1))
    states2 = jax.random.normal(k_s2, (big_b, state_dim), jnp.float32)
    actions2 = jax.random.randint(k_a2, (big_b,), 0, action_dim, jnp.int32)
    out2 = discrete_discriminator_forward(states2, actions2, params, tile_b=128)
    out2 = jax.block_until_ready(out2)
    ref2 = reference_forward(states2, actions2, params)
    assert out2.shape == (big_b, 1)
    assert jnp.allclose(out2, ref2, atol=1e-5, rtol=1e-5)

    # Default (large) tile selection: B=1000 -> tb=512, 2 grid steps, ragged tail.
    b3_ = 1000
    k_s3, k_a3 = jax.random.split(jax.random.PRNGKey(2))
    states3 = jax.random.normal(k_s3, (b3_, state_dim), jnp.float32)
    actions3 = jax.random.randint(k_a3, (b3_,), 0, action_dim, jnp.int32)
    out3 = discrete_discriminator_forward(states3, actions3, params)
    out3 = jax.block_until_ready(out3)
    ref3 = reference_forward(states3, actions3, params)
    assert out3.shape == (b3_, 1)
    assert jnp.allclose(out3, ref3, atol=1e-5, rtol=1e-5)

    # Optional bf16-operand path (f32 accumulation), looser tolerance.
    out_bf16 = discrete_discriminator_forward(states, actions, params,
                                              compute_dtype=jnp.bfloat16)
    out_bf16 = jax.block_until_ready(out_bf16)
    assert jnp.allclose(out_bf16, ref, atol=3e-2, rtol=3e-2)

    print("KERNEL_OK")
</pallas_src>

<mosaic_0001>
module attributes {stable_mosaic.version = 11 : i64} {
  func.func @_disc_kernel(%arg0: i32, %arg1: memref<8x16xf32, #tpu.memory_space<vmem>>, %arg2: memref<1x8xi32, #tpu.memory_space<vmem>>, %arg3: memref<32x8xf32, #tpu.memory_space<vmem>>, %arg4: memref<32x16xf32, #tpu.memory_space<vmem>>, %arg5: memref<32x32xf32, #tpu.memory_space<vmem>>, %arg6: memref<32x1xf32, #tpu.memory_space<vmem>>, %arg7: memref<32x1xf32, #tpu.memory_space<vmem>>, %arg8: memref<1x1xf32, #tpu.memory_space<smem>>, %arg9: memref<1x8xf32, #tpu.memory_space<vmem>>) attributes {dimension_semantics = [#tpu.dimension_semantics<parallel>], iteration_bounds = array<i64: 1>, scalar_prefetch = 0 : i64, scratch_operands = 0 : i64, tpu.core_type = #tpu.core_type<tc>, window_params = [{transform_indices = @transform_0, window_bounds = array<i64: 8, 16>}, {transform_indices = @transform_1, window_bounds = array<i64: 1, 8>}, {pipeline_mode = #tpu.pipeline_mode<synchronous>, transform_indices = @transform_2, window_bounds = array<i64: 32, 8>}, {pipeline_mode = #tpu.pipeline_mode<synchronous>, transform_indices = @transform_3, window_bounds = array<i64: 32, 16>}, {pipeline_mode = #tpu.pipeline_mode<synchronous>, transform_indices = @transform_4, window_bounds = array<i64: 32, 32>}, {pipeline_mode = #tpu.pipeline_mode<synchronous>, transform_indices = @transform_5, window_bounds = array<i64: 32, 1>}, {pipeline_mode = #tpu.pipeline_mode<synchronous>, transform_indices = @transform_6, window_bounds = array<i64: 32, 1>}, {transform_indices = @transform_7, window_bounds = array<i64: 1, 1>}, {transform_indices = @transform_8, window_bounds = array<i64: 1, 8>}]} {
    %c0 = arith.constant 0 : index
    %c0_0 = arith.constant 0 : index
    %0 = vector.load %arg1[%c0, %c0_0] : memref<8x16xf32, #tpu.memory_space<vmem>>, vector<8x16xf32>
    %c0_1 = arith.constant 0 : index
    %c0_2 = arith.constant 0 : index
    %1 = vector.load %arg2[%c0_1, %c0_2] : memref<1x8xi32, #tpu.memory_space<vmem>>, vector<1x8xi32>
    %c0_3 = arith.constant 0 : index
    %c0_4 = arith.constant 0 : index
    %2 = vector.load %arg4[%c0_3, %c0_4] : memref<32x16xf32, #tpu.memory_space<vmem>>, vector<32x16xf32>
    %cst = arith.constant dense<0.000000e+00> : vector<32x8xf32>
    %3 = tpu.matmul %2, %0, %cst {dimension_numbers = #tpu.dot_dimension_numbers<[1], [1], [0], [0], [0, 0, 1, 0], [], []>} : vector<32x16xf32>, vector<8x16xf32>, vector<32x8xf32> -> vector<32x8xf32>
    %4 = tpu.iota {dimensions = array<i32: 0>} : vector<8x8xi32>
    %5 = vector.broadcast %1 : vector<1x8xi32> to vector<8x8xi32>
    %6 = arith.cmpi eq, %4, %5 : vector<8x8xi32>
    %7 = arith.extui %6 : vector<8x8xi1> to vector<8x8xi32>
    %8 = arith.sitofp %7 : vector<8x8xi32> to vector<8x8xf32>
    %c0_5 = arith.constant 0 : index
    %c0_6 = arith.constant 0 : index
    %9 = vector.load %arg3[%c0_5, %c0_6] : memref<32x8xf32, #tpu.memory_space<vmem>>, vector<32x8xf32>
    %cst_7 = arith.constant dense<0.000000e+00> : vector<32x8xf32>
    %10 = tpu.matmul %9, %8, %cst_7 {dimension_numbers = #tpu.dot_dimension_numbers<[1], [0], [0], [1], [0, 0, 1, 1], [], []>} : vector<32x8xf32>, vector<8x8xf32>, vector<32x8xf32> -> vector<32x8xf32>
    %11 = arith.addf %3, %10 : vector<32x8xf32>
    %12 = math.tanh %11 : vector<32x8xf32>
    %c0_8 = arith.constant 0 : index
    %c0_9 = arith.constant 0 : index
    %13 = vector.load %arg5[%c0_8, %c0_9] : memref<32x32xf32, #tpu.memory_space<vmem>>, vector<32x32xf32>
    %cst_10 = arith.constant dense<0.000000e+00> : vector<32x8xf32>
    %14 = tpu.matmul %13, %12, %cst_10 {dimension_numbers = #tpu.dot_dimension_numbers<[1], [0], [0], [1], [0, 0, 1, 1], [], []>} : vector<32x32xf32>, vector<32x8xf32>, vector<32x8xf32> -> vector<32x8xf32>
    %c0_11 = arith.constant 0 : index
    %c0_12 = arith.constant 0 : index
    %15 = vector.load %arg6[%c0_11, %c0_12] : memref<32x1xf32, #tpu.memory_space<vmem>>, vector<32x1xf32>
    %16 = vector.broadcast %15 : vector<32x1xf32> to vector<32x8xf32>
    %17 = arith.addf %14, %16 : vector<32x8xf32>
    %18 = math.tanh %17 : vector<32x8xf32>
    %c0_13 = arith.constant 0 : index
    %c0_14 = arith.constant 0 : index
    %19 = vector.load %arg7[%c0_13, %c0_14] : memref<32x1xf32, #tpu.memory_space<vmem>>, vector<32x1xf32>
    %20 = vector.broadcast %19 : vector<32x1xf32> to vector<32x8xf32>
    %21 = arith.mulf %18, %20 : vector<32x8xf32>
    %cst_15 = arith.constant dense<0.000000e+00> : vector<8xf32>
    %22 = vector.multi_reduction <add>, %21, %cst_15 [0] : vector<32x8xf32> to vector<8xf32>
    %23 = vector.shape_cast %22 : vector<8xf32> to vector<1x8xf32>
    %c0_16 = arith.constant 0 : index
    %c0_17 = arith.constant 0 : index
    %24 = memref.load %arg8[%c0_16, %c0_17] : memref<1x1xf32, #tpu.memory_space<smem>>
    %25 = vector.broadcast %24 : f32 to vector<1x8xf32>
    %26 = arith.addf %23, %25 : vector<1x8xf32>
    %27 = arith.negf %26 : vector<1x8xf32>
    %28 = math.exp %27 : vector<1x8xf32>
    %cst_18 = arith.constant 1.000000e+00 : f32
    %29 = vector.broadcast %cst_18 : f32 to vector<1x8xf32>
    %30 = arith.addf %29, %28 : vector<1x8xf32>
    %31 = arith.divf %29, %30 : vector<1x8xf32>
    %c0_19 = arith.constant 0 : index
    %c0_20 = arith.constant 0 : index
    %32 = vector.load %arg9[%c0_19, %c0_20] : memref<1x8xf32, #tpu.memory_space<vmem>>, vector<1x8xf32>
    tpu.vector_store %arg9[%c0_19, %c0_20], %31 {strides = array<i32>} : memref<1x8xf32, #tpu.memory_space<vmem>>, vector<1x8xf32>,
    return
  }
  func.func @transform_0(%arg0: i32) -> (i32, i32) {
    %c0_i32 = arith.constant 0 : i32
    %c0_i32_0 = arith.constant 0 : i32
    return %arg0, %c0_i32 : i32, i32
  }
  func.func @transform_1(%arg0: i32) -> (i32, i32) {
    %c0_i32 = arith.constant 0 : i32
    %c0_i32_0 = arith.constant 0 : i32
    return %c0_i32, %arg0 : i32, i32
  }
  func.func @transform_2(%arg0: i32) -> (i32, i32) {
    %c0_i32 = arith.constant 0 : i32
    %c0_i32_0 = arith.constant 0 : i32
    %c0_i32_1 = arith.constant 0 : i32
    return %c0_i32, %c0_i32_0 : i32, i32
  }
  func.func @transform_3(%arg0: i32) -> (i32, i32) {
    %c0_i32 = arith.constant 0 : i32
    %c0_i32_0 = arith.constant 0 : i32
    %c0_i32_1 = arith.constant 0 : i32
    return %c0_i32, %c0_i32_0 : i32, i32
  }
  func.func @transform_4(%arg0: i32) -> (i32, i32) {
    %c0_i32 = arith.constant 0 : i32
    %c0_i32_0 = arith.constant 0 : i32
    %c0_i32_1 = arith.constant 0 : i32
    return %c0_i32, %c0_i32_0 : i32, i32
  }
  func.func @transform_5(%arg0: i32) -> (i32, i32) {
    %c0_i32 = arith.constant 0 : i32
    %c0_i32_0 = arith.constant 0 : i32
    %c0_i32_1 = arith.constant 0 : i32
    return %c0_i32, %c0_i32_0 : i32, i32
  }
  func.func @transform_6(%arg0: i32) -> (i32, i32) {
    %c0_i32 = arith.constant 0 : i32
    %c0_i32_0 = arith.constant 0 : i32
    %c0_i32_1 = arith.constant 0 : i32
    return %c0_i32, %c0_i32_0 : i32, i32
  }
  func.func @transform_7(%arg0: i32) -> (i32, i32) {
    %c0_i32 = arith.constant 0 : i32
    %c0_i32_0 = arith.constant 0 : i32
    %c0_i32_1 = arith.constant 0 : i32
    return %c0_i32, %c0_i32_0 : i32, i32
  }
  func.func @transform_8(%arg0: i32) -> (i32, i32) {
    %c0_i32 = arith.constant 0 : i32
    %c0_i32_0 = arith.constant 0 : i32
    return %c0_i32, %arg0 : i32, i32
  }
}

</mosaic_0001>

<llo_original>
// kernel: tpu_custom_call.1
$region0: #{tpu_custom_call.1}
  #allocation0 [shape = 'u32[]', space=smem, size = 0x4, offset = 0x4, fixed_abs, tag = 'smem constant byte address 0x4 - core index']
  #allocation1 [shape = 'u32[144,128]{1,0:T(1,128)}', space=vmem, size = 0x12000, scoped, tag = 'internal scratch']
  #allocation2 [shape = 'f32[1,1]{1,0:T(1,128)S(6)}', space=smem, size = 0x200, scoped, tag = 'scoped memory for tpu_custom_call.1']
  %s0 = inlined_call_operand.vmem [shape: f32[8,16], index: 0, kind: input, shape index: {}]
  %s1 = inlined_call_operand.vmem [shape: s32[1,8], index: 1, kind: input, shape index: {}]
  %s2 = inlined_call_operand.vmem [shape: f32[32,8], index: 2, kind: input, shape index: {}]
  %s3 = inlined_call_operand.vmem [shape: f32[32,16], index: 3, kind: input, shape index: {}]
  %s4 = inlined_call_operand.vmem [shape: f32[32,32], index: 4, kind: input, shape index: {}]
  %s5 = inlined_call_operand.vmem [shape: f32[32,1], index: 5, kind: input, shape index: {}]
  %s6 = inlined_call_operand.vmem [shape: f32[32,1], index: 6, kind: input, shape index: {}]
  %s7 = inlined_call_operand.<no memory space> [shape: f32[1,1], index: 7, kind: input, shape index: {}]
  %s8 = inlined_call_operand.hbm [shape: f32[1,8], index: 8, kind: output, shape index: {}]
  %s9 = sld [smem:[#allocation0]]
  $region42: #{tpu_custom_call.1} parent=0
    _
  %s11 = ssub.s32 1, %s9
  %s12 = scalar_select 0, %s11, %s9
  %13 = sst [smem:[#allocation2]] %s7
  $region1: #{tpu_custom_call.1} parent=0
    #allocation3 [shape = 'u8[512]{0}', space=vmem, size = 0x400, scoped, tag = 'output window, operand 0, single buffered']
    #allocation4 [shape = 's32[1]{0}', space=sflag, size = 0x4, scoped, tag = 'scoped memory for tpu_custom_call.1']
    %14 = vsyncpa [#allocation4], 0
    // Predicated region
    $region2: #{tpu_custom_call.1} parent=1 // pred_check
      _
    $region3: #{tpu_custom_call.1} parent=1 // pred_check_branch
      %16 = sbr.rel (0) target = $region5
    $region4: #{tpu_custom_call.1} parent=1 // pred_region
      _
    $region5: #{tpu_custom_call.1} parent=1 // pred_fallthru
      _
    // Predicated region
    $region6: #{tpu_custom_call.1} parent=1 // pred_check
      _
    $region7: #{tpu_custom_call.1} parent=1 // pred_check_branch
      %18 = sbr.rel (0) target = $region9
    $region8: #{tpu_custom_call.1} parent=1 // pred_region
      _
    $region9: #{tpu_custom_call.1} parent=1 // pred_fallthru
      _
    // Predicated region
    $region10: #{tpu_custom_call.1} parent=1 // pred_check
      _
    $region11: #{tpu_custom_call.1} parent=1 // pred_check_branch
      %20 = sbr.rel (0) target = $region13
    $region12: #{tpu_custom_call.1} parent=1 // pred_region
      _
    $region13: #{tpu_custom_call.1} parent=1 // pred_fallthru
      _
    // Predicated region
    $region14: #{tpu_custom_call.1} parent=1 // pred_check
      _
    $region15: #{tpu_custom_call.1} parent=1 // pred_check_branch
      %22 = sbr.rel (0) target = $region17
    $region16: #{tpu_custom_call.1} parent=1 // pred_region
      _
    $region17: #{tpu_custom_call.1} parent=1 // pred_fallthru
      _
    // Predicated region
    $region18: #{tpu_custom_call.1} parent=1 // pred_check
      _
    $region19: #{tpu_custom_call.1} parent=1 // pred_check_branch
      %24 = sbr.rel (0) target = $region21
    $region20: #{tpu_custom_call.1} parent=1 // pred_region
      _
    $region21: #{tpu_custom_call.1} parent=1 // pred_fallthru
      _
    // Predicated region
    $region22: #{tpu_custom_call.1} parent=1 // pred_check
      _
    $region23: #{tpu_custom_call.1} parent=1 // pred_check_branch
      %26 = sbr.rel (0) target = $region25
    $region24: #{tpu_custom_call.1} parent=1 // pred_region
      _
    $region25: #{tpu_custom_call.1} parent=1 // pred_fallthru
      _
    // Predicated region
    $region26: #{tpu_custom_call.1} parent=1 // pred_check
      _
    $region27: #{tpu_custom_call.1} parent=1 // pred_check_branch
      %28 = sbr.rel (0) target = $region29
    $region28: #{tpu_custom_call.1} parent=1 // pred_region
      _
    $region29: #{tpu_custom_call.1} parent=1 // pred_fallthru
      _
    // Predicated region
    $region30: #{tpu_custom_call.1} parent=1 // pred_check
      _
    $region31: #{tpu_custom_call.1} parent=1 // pred_check_branch
      %30 = sbr.rel (0) target = $region33
    $region32: #{tpu_custom_call.1} parent=1 // pred_region
      _
    $region33: #{tpu_custom_call.1} parent=1 // pred_fallthru
      _
    %v31 = vld [vmem:[%s0] sm:$0xff]
    %v32 = vld [vmem:[%s1] sm:$0x1]
    %v33 = vld [vmem:[%s3] sm:$0xff]
    %v34 = vld [vmem:[%s3 + $0x8] sm:$0xff]
    %v35 = vld [vmem:[%s3 + $0x10] sm:$0xff]
    %v36 = vld [vmem:[%s3 + $0x18] sm:$0xff]
    %v37 = vlaneseq
    %v38 = vshrl.u32 %v37, 7
    %v39 = vlaneseq
    %v40 = vshrl.u32 %v39, 7
    %v41 = vsub.s32 0, %v40
    %v42 = vrot.slane %v32, %v41
    %vm43 = vcmp.eq.s32.totalorder %v38, %v42
    %v44 = vsel %vm43, 1, 0
    %v45 = vcvt.s32.f32 %v44
    %v46 = vld [vmem:[%s2] sm:$0xff]
    %v47 = vld [vmem:[%s2 + $0x8] sm:$0xff]
    %v48 = vld [vmem:[%s2 + $0x10] sm:$0xff]
    %v49 = vld [vmem:[%s2 + $0x18] sm:$0xff]
    %vm50 = vcmask 64512
    %v52 = vsel %vm50, %v46, 0
    %v55 = vsel %vm50, %v47, 0
    %v58 = vsel %vm50, %v48, 0
    %v61 = vsel %vm50, %v49, 0
    %63 = vmatprep.subr.mxu0 0.0
    %64 = vmatpush1.msra.mxu0 0.0
    %65 = vmatprep.subr.mxu0 0.0
    %66 = vmatpush1.msra.mxu0 0.0
    %67 = vmatprep.subr.mxu0 0.0
    %68 = vmatpush1.msra.mxu0 0.0
    %69 = vmatprep.subr.mxu0 0.0
    %70 = vmatpush1.msra.mxu0 0.0
    %71 = vmatprep.subr.mxu0 0.0
    %72 = vmatpush1.msra.mxu0 0.0
    %73 = vmatprep.subr.mxu0 0.0
    %74 = vmatpush1.msra.mxu0 0.0
    %75 = vmatprep.subr.mxu0 0.0
    %76 = vmatpush1.msra.mxu0 0.0
    %77 = vmatprep.subr.mxu0 0.0
    %78 = vmatpush1.msra.mxu0 0.0
    %79 = vmatprep.subr.mxu0 0.0
    %80 = vmatpush1.msra.mxu0 0.0
    %81 = vmatprep.subr.mxu0 0.0
    %82 = vmatpush1.msra.mxu0 0.0
    %83 = vmatprep.subr.mxu0 0.0
    %84 = vmatpush1.msra.mxu0 0.0
    %85 = vmatprep.subr.mxu0 0.0
    %86 = vmatpush1.msra.mxu0 0.0
    %87 = vmatprep.subr.mxu0 0.0
    %88 = vmatpush1.msra.mxu0 0.0
    %89 = vmatprep.subr.mxu0 0.0
    %90 = vmatpush1.msra.mxu0 0.0
    %91 = vmatprep.subr.mxu0 0.0
    %92 = vmatpush1.msra.mxu0 0.0
    %93 = vmatprep.subr.mxu0 0.0
    %94 = vmatpush1.msra.mxu0 %v45
    %95 = vmatprep.subr.mxu0 0.0
    %96 = vmatpush2.msra.mxu0 0.0
    %97 = vmatprep.subr.mxu0 0.0
    %98 = vmatpush2.msra.mxu0 0.0
    %99 = vmatprep.subr.mxu0 0.0
    %100 = vmatpush2.msra.mxu0 0.0
    %101 = vmatprep.subr.mxu0 0.0
    %102 = vmatpush2.msra.mxu0 0.0
    %103 = vmatprep.subr.mxu0 0.0
    %104 = vmatpush2.msra.mxu0 0.0
    %105 = vmatprep.subr.mxu0 0.0
    %106 = vmatpush2.msra.mxu0 0.0
    %107 = vmatprep.subr.mxu0 0.0
    %108 = vmatpush2.msra.mxu0 0.0
    %109 = vmatprep.subr.mxu0 0.0
    %110 = vmatpush2.msra.mxu0 0.0
    %111 = vmatprep.subr.mxu0 0.0
    %112 = vmatpush2.msra.mxu0 0.0
    %113 = vmatprep.subr.mxu0 0.0
    %114 = vmatpush2.msra.mxu0 0.0
    %115 = vmatprep.subr.mxu0 0.0
    %116 = vmatpush2.msra.mxu0 0.0
    %117 = vmatprep.subr.mxu0 0.0
    %118 = vmatpush2.msra.mxu0 0.0
    %119 = vmatprep.subr.mxu0 0.0
    %120 = vmatpush2.msra.mxu0 0.0
    %121 = vmatprep.subr.mxu0 0.0
    %122 = vmatpush2.msra.mxu0 0.0
    %123 = vmatprep.subr.mxu0 0.0
    %124 = vmatpush2.msra.mxu0 0.0
    %125 = vmatprep.subr.mxu0 0.0
    %126 = vmatpush2.msra.mxu0 0.0
    %127 = vmatprep.mubr.f32.mxu0 0.0
    %128 = vmatmul.mubr.f32.gmra.mxu0 %v52
    %v129 = vpop.f32.mrf.mxu0
    %v130 = vadd.f32 0.0, %v129
    %v131 = vpop.f32.mrf.mxu0
    %132 = vmatprep.mubr.f32.mxu0 0.0
    %133 = vmatmul.mubr.f32.gmra.mxu0 %v55
    %v134 = vpop.f32.mrf.mxu0
    %v135 = vadd.f32 0.0, %v134
    %v136 = vpop.f32.mrf.mxu0
    %137 = vmatprep.mubr.f32.mxu0 0.0
    %138 = vmatmul.mubr.f32.gmra.mxu0 %v58
    %v139 = vpop.f32.mrf.mxu0
    %v140 = vadd.f32 0.0, %v139
    %v141 = vpop.f32.mrf.mxu0
    %142 = vmatprep.mubr.f32.mxu0 0.0
    %143 = vmatmul.mubr.f32.gmra.mxu0 %v61
    %v144 = vpop.f32.mrf.mxu0
    %v145 = vadd.f32 0.0, %v144
    %v146 = vpop.f32.mrf.mxu0
    %147 = vdwg.mxu0
    %vm148 = vcmask 130048
    %v150 = vsel %vm148, %v33, 0
    %v153 = vsel %vm148, %v34, 0
    %v156 = vsel %vm148, %v35, 0
    %v159 = vsel %vm148, %v36, 0
    %v162 = vsel %vm148, %v31, 0
    %164 = vmatprep.subr.mxu0 0.0
    %165 = vmatpush1.xpose.msra.mxu0 0.0
    %166 = vmatprep.subr.mxu0 0.0
    %167 = vmatpush1.xpose.msra.mxu0 0.0
    %168 = vmatprep.subr.mxu0 0.0
    %169 = vmatpush1.xpose.msra.mxu0 0.0
    %170 = vmatprep.subr.mxu0 0.0
    %171 = vmatpush1.xpose.msra.mxu0 0.0
    %172 = vmatprep.subr.mxu0 0.0
    %173 = vmatpush1.xpose.msra.mxu0 0.0
    %174 = vmatprep.subr.mxu0 0.0
    %175 = vmatpush1.xpose.msra.mxu0 0.0
    %176 = vmatprep.subr.mxu0 0.0
    %177 = vmatpush1.xpose.msra.mxu0 0.0
    %178 = vmatprep.subr.mxu0 0.0
    %179 = vmatpush1.xpose.msra.mxu0 0.0
    %180 = vmatprep.subr.mxu0 0.0
    %181 = vmatpush1.xpose.msra.mxu0 0.0
    %182 = vmatprep.subr.mxu0 0.0
    %183 = vmatpush1.xpose.msra.mxu0 0.0
    %184 = vmatprep.subr.mxu0 0.0
    %185 = vmatpush1.xpose.msra.mxu0 0.0
    %186 = vmatprep.subr.mxu0 0.0
    %187 = vmatpush1.xpose.msra.mxu0 0.0
    %188 = vmatprep.subr.mxu0 0.0
    %189 = vmatpush1.xpose.msra.mxu0 0.0
    %190 = vmatprep.subr.mxu0 0.0
    %191 = vmatpush1.xpose.msra.mxu0 0.0
    %192 = vmatprep.subr.mxu0 0.0
    %193 = vmatpush1.xpose.msra.mxu0 0.0
    %194 = vmatprep.subr.mxu0 0.0
    %195 = vmatpush1.xpose.msra.mxu0 %v162
    %196 = vmatprep.subr.mxu0 0.0
    %197 = vmatpush2.xpose.msra.mxu0 0.0
    %198 = vmatprep.subr.mxu0 0.0
    %199 = vmatpush2.xpose.msra.mxu0 0.0
    %200 = vmatprep.subr.mxu0 0.0
    %201 = vmatpush2.xpose.msra.mxu0 0.0
    %202 = vmatprep.subr.mxu0 0.0
    %203 = vmatpush2.xpose.msra.mxu0 0.0
    %204 = vmatprep.subr.mxu0 0.0
    %205 = vmatpush2.xpose.msra.mxu0 0.0
    %206 = vmatprep.subr.mxu0 0.0
    %207 = vmatpush2.xpose.msra.mxu0 0.0
    %208 = vmatprep.subr.mxu0 0.0
    %209 = vmatpush2.xpose.msra.mxu0 0.0
    %210 = vmatprep.subr.mxu0 0.0
    %211 = vmatpush2.xpose.msra.mxu0 0.0
    %212 = vmatprep.subr.mxu0 0.0
    %213 = vmatpush2.xpose.msra.mxu0 0.0
    %214 = vmatprep.subr.mxu0 0.0
    %215 = vmatpush2.xpose.msra.mxu0 0.0
    %216 = vmatprep.subr.mxu0 0.0
    %217 = vmatpush2.xpose.msra.mxu0 0.0
    %218 = vmatprep.subr.mxu0 0.0
    %219 = vmatpush2.xpose.msra.mxu0 0.0
    %220 = vmatprep.subr.mxu0 0.0
    %221 = vmatpush2.xpose.msra.mxu0 0.0
    %222 = vmatprep.subr.mxu0 0.0
    %223 = vmatpush2.xpose.msra.mxu0 0.0
    %224 = vmatprep.subr.mxu0 0.0
    %225 = vmatpush2.xpose.msra.mxu0 0.0
    %226 = vmatprep.subr.mxu0 0.0
    %227 = vmatpush2.xpose.msra.mxu0 0.0
    %228 = vmatprep.mubr.f32.mxu0 0.0
    %229 = vmatmul.mubr.f32.gmra.mxu0 %v150
    %v230 = vpop.f32.mrf.mxu0
    %v231 = vadd.f32 %v130, %v230
    %v232 = vpop.f32.mrf.mxu0
    %233 = vmatprep.mubr.f32.mxu0 0.0
    %234 = vmatmul.mubr.f32.gmra.mxu0 %v153
    %v235 = vpop.f32.mrf.mxu0
    %v236 = vadd.f32 %v135, %v235
    %v237 = vpop.f32.mrf.mxu0
    %238 = vmatprep.mubr.f32.mxu0 0.0
    %239 = vmatmul.mubr.f32.gmra.mxu0 %v156
    %v240 = vpop.f32.mrf.mxu0
    %v241 = vadd.f32 %v140, %v240
    %v242 = vpop.f32.mrf.mxu0
    %243 = vmatprep.mubr.f32.mxu0 0.0
    %244 = vmatmul.mubr.f32.gmra.mxu0 %v159
    %v245 = vpop.f32.mrf.mxu0
    %v246 = vadd.f32 %v145, %v245
    %v247 = vpop.f32.mrf.mxu0
    %248 = vdwg.mxu0
    %v249 = vtanh.pop %v231
    %v250 = vtanh.pop %v236
    %v251 = vtanh.pop %v241
    %v252 = vtanh.pop %v246
    %v253 = vld [vmem:[%s4] sm:$0xff]
    %v254 = vld [vmem:[%s4 + $0x8] sm:$0xff]
    %v255 = vld [vmem:[%s4 + $0x10] sm:$0xff]
    %v256 = vld [vmem:[%s4 + $0x18] sm:$0xff]
    %v257 = vld [vmem:[%s5] sm:$0xff]
    %v258 = vld [vmem:[%s5 + $0x8] sm:$0xff]
    %v259 = vld [vmem:[%s5 + $0x10] sm:$0xff]
    %v260 = vld [vmem:[%s5 + $0x18] sm:$0xff]
    %262 = vset.pattern.permute.xlu0 0
    %263 = vperm.xlu0 %262, %v257
    %v264 = vpop.permute.xlu0 %263
    %267 = vset.pattern.permute.xlu0 0
    %268 = vperm.xlu0 %267, %v258
    %v269 = vpop.permute.xlu0 %268
    %272 = vset.pattern.permute.xlu0 0
    %273 = vperm.xlu0 %272, %v259
    %v274 = vpop.permute.xlu0 %273
    %277 = vset.pattern.permute.xlu0 0
    %278 = vperm.xlu0 %277, %v260
    %v279 = vpop.permute.xlu0 %278
    %vm281 = vcmask 261120
    %v283 = vsel %vm281, %v253, 0
    %v286 = vsel %vm281, %v254, 0
    %v289 = vsel %vm281, %v255, 0
    %v292 = vsel %vm281, %v256, 0
    %294 = vmatprep.subr.mxu0 0.0
    %295 = vmatpush1.msra.mxu0 0.0
    %296 = vmatprep.subr.mxu0 0.0
    %297 = vmatpush1.msra.mxu0 0.0
    %298 = vmatprep.subr.mxu0 0.0
    %299 = vmatpush1.msra.mxu0 0.0
    %300 = vmatprep.subr.mxu0 0.0
    %301 = vmatpush1.msra.mxu0 0.0
    %302 = vmatprep.subr.mxu0 0.0
    %303 = vmatpush1.msra.mxu0 0.0
    %304 = vmatprep.subr.mxu0 0.0
    %305 = vmatpush1.msra.mxu0 0.0
    %306 = vmatprep.subr.mxu0 0.0
    %307 = vmatpush1.msra.mxu0 0.0
    %308 = vmatprep.subr.mxu0 0.0
    %309 = vmatpush1.msra.mxu0 0.0
    %310 = vmatprep.subr.mxu0 0.0
    %311 = vmatpush1.msra.mxu0 0.0
    %312 = vmatprep.subr.mxu0 0.0
    %313 = vmatpush1.msra.mxu0 0.0
    %314 = vmatprep.subr.mxu0 0.0
    %315 = vmatpush1.msra.mxu0 0.0
    %316 = vmatprep.subr.mxu0 0.0
    %317 = vmatpush1.msra.mxu0 0.0
    %318 = vmatprep.subr.mxu0 0.0
    %319 = vmatpush1.msra.mxu0 %v252
    %320 = vmatprep.subr.mxu0 0.0
    %321 = vmatpush1.msra.mxu0 %v251
    %322 = vmatprep.subr.mxu0 0.0
    %323 = vmatpush1.msra.mxu0 %v250
    %324 = vmatprep.subr.mxu0 0.0
    %325 = vmatpush1.msra.mxu0 %v249
    %326 = vmatprep.subr.mxu0 0.0
    %327 = vmatpush2.msra.mxu0 0.0
    %328 = vmatprep.subr.mxu0 0.0
    %329 = vmatpush2.msra.mxu0 0.0
    %330 = vmatprep.subr.mxu0 0.0
    %331 = vmatpush2.msra.mxu0 0.0
    %332 = vmatprep.subr.mxu0 0.0
    %333 = vmatpush2.msra.mxu0 0.0
    %334 = vmatprep.subr.mxu0 0.0
    %335 = vmatpush2.msra.mxu0 0.0
    %336 = vmatprep.subr.mxu0 0.0
    %337 = vmatpush2.msra.mxu0 0.0
    %338 = vmatprep.subr.mxu0 0.0
    %339 = vmatpush2.msra.mxu0 0.0
    %340 = vmatprep.subr.mxu0 0.0
    %341 = vmatpush2.msra.mxu0 0.0
    %342 = vmatprep.subr.mxu0 0.0
    %343 = vmatpush2.msra.mxu0 0.0
    %344 = vmatprep.subr.mxu0 0.0
    %345 = vmatpush2.msra.mxu0 0.0
    %346 = vmatprep.subr.mxu0 0.0
    %347 = vmatpush2.msra.mxu0 0.0
    %348 = vmatprep.subr.mxu0 0.0
    %349 = vmatpush2.msra.mxu0 0.0
    %350 = vmatprep.subr.mxu0 0.0
    %351 = vmatpush2.msra.mxu0 0.0
    %352 = vmatprep.subr.mxu0 0.0
    %353 = vmatpush2.msra.mxu0 0.0
    %354 = vmatprep.subr.mxu0 0.0
    %355 = vmatpush2.msra.mxu0 0.0
    %356 = vmatprep.subr.mxu0 0.0
    %357 = vmatpush2.msra.mxu0 0.0
    %358 = vmatprep.mubr.f32.mxu0 0.0
    %359 = vmatmul.mubr.f32.gmra.mxu0 %v283
    %v360 = vpop.f32.mrf.mxu0
    %v361 = vadd.f32 %v264, %v360
    %v362 = vpop.f32.mrf.mxu0
    %363 = vmatprep.mubr.f32.mxu0 0.0
    %364 = vmatmul.mubr.f32.gmra.mxu0 %v286
    %v365 = vpop.f32.mrf.mxu0
    %v366 = vadd.f32 %v269, %v365
    %v367 = vpop.f32.mrf.mxu0
    %368 = vmatprep.mubr.f32.mxu0 0.0
    %369 = vmatmul.mubr.f32.gmra.mxu0 %v289
    %v370 = vpop.f32.mrf.mxu0
    %v371 = vadd.f32 %v274, %v370
    %v372 = vpop.f32.mrf.mxu0
    %373 = vmatprep.mubr.f32.mxu0 0.0
    %374 = vmatmul.mubr.f32.gmra.mxu0 %v292
    %v375 = vpop.f32.mrf.mxu0
    %v376 = vadd.f32 %v279, %v375
    %v377 = vpop.f32.mrf.mxu0
    %378 = vdwg.mxu0
    %v379 = vtanh.pop %v361
    %v380 = vtanh.pop %v366
    %v381 = vtanh.pop %v371
    %v382 = vtanh.pop %v376
    %v383 = vld [vmem:[%s6] sm:$0xff]
    %v384 = vld [vmem:[%s6 + $0x8] sm:$0xff]
    %v385 = vld [vmem:[%s6 + $0x10] sm:$0xff]
    %v386 = vld [vmem:[%s6 + $0x18] sm:$0xff]
    %388 = vset.pattern.permute.xlu0 0
    %389 = vperm.xlu0 %388, %v383
    %v390 = vpop.permute.xlu0 %389
    %393 = vset.pattern.permute.xlu0 0
    %394 = vperm.xlu0 %393, %v384
    %v395 = vpop.permute.xlu0 %394
    %398 = vset.pattern.permute.xlu0 0
    %399 = vperm.xlu0 %398, %v385
    %v400 = vpop.permute.xlu0 %399
    %403 = vset.pattern.permute.xlu0 0
    %404 = vperm.xlu0 %403, %v386
    %v405 = vpop.permute.xlu0 %404
    %v407 = vmul.f32 %v379, %v390
    %v408 = vmul.f32 %v380, %v395
    %v409 = vmul.f32 %v381, %v400
    %v410 = vmul.f32 %v382, %v405
    %v411 = vsel %vm50, %v407, 0.0
    %v412 = vsel %vm50, %v408, 0.0
    %v413 = vadd.f32 %v411, %v412
    %v414 = vsel %vm50, %v409, 0.0
    %v415 = vadd.f32 %v413, %v414
    %v416 = vsel %vm50, %v410, 0.0
    %v417 = vadd.f32 %v415, %v416
    %v418 = vrot.slane %v417, 4
    %v419 = vadd.f32 %v417, %v418
    %v420 = vrot.slane %v419, 2
    %v421 = vadd.f32 %v419, %v420
    %v422 = vrot.slane %v421, 1
    %v423 = vadd.f32 %v421, %v422
    %s424 = sld [smem:[#allocation2]]
    %v425 = vstv %s424
    %v426 = vadd.f32 %v423, %v425
    %v427 = vxor.u32 %v426, 2147483648
    %v428 = vmul.f32 %v427, 1.442695
    %v429 = vpow.pop %v428
    %v430 = vadd.f32 %v429, 1.0
    %v431 = vrcp.pop %v430
    %v432 = vmul.f32 1.0, %v431
    %vm433 = vcmask 57344
    %434 = vst.msk [vmem:[#allocation3] sm:$0x1] %vm433, %v432
    // Predicated region
    $region34: #{tpu_custom_call.1} parent=1 // pred_check
      _
    $region35: #{tpu_custom_call.1} parent=1 // pred_check_branch
      %436 = sbr.rel (0) target = $region37
    $region36: #{tpu_custom_call.1} parent=1 // pred_region
      %s438 = ssub.s32 16, 16
      %439 = vsyncadd [#allocation4], %s438
      %s441 = sshll.u32 [#allocation3], 4
      %s442 = int_to_ptr.vmem [resolvable:$true] %s441
      %444 = dma.vmem_to_hbm [thread:$0]  %s442, 16, %s8, [#allocation4]
    $region37: #{tpu_custom_call.1} parent=1 // pred_fallthru
      _
    // Predicated region
    $region38: #{tpu_custom_call.1} parent=1 // pred_check
      _
    $region39: #{tpu_custom_call.1} parent=1 // pred_check_branch
      %446 = sbr.rel (0) target = $region41
    $region40: #{tpu_custom_call.1} parent=1 // pred_region
      %447 = dma.done [#allocation4], 16
    $region41: #{tpu_custom_call.1} parent=1 // pred_fallthru
      _
    %448 = vsyncpa [#allocation4], 1

</llo_original>
